<compile_context>
chip_gen: v6e
topology: v6e:2x2x1
jax: 0.10.0
libtpu: 0.0.40
codegen_flags: <defaults>
</compile_context>

<pallas_src>
import jax
import jax.numpy as jnp
from jax.experimental import pallas as pl
from jax.experimental.pallas import tpu as pltpu

_LANES = 128                 # samples per slab row (one output lane per sample)
_IN_F = 2                    # fc1 fan-in
_ROW_W = _LANES * _IN_F      # 256: slab row width (samples x features, interleaved)
_TR_MAX = 2048               # max slab rows per grid step (~2 MiB input tile)


def _mlp_kernel(xw_ref, e_ref, w1_ref, b1_ref, w2_ref, b2_ref, o_ref):
    # xw_ref: (tr, 256) f32 VMEM -- 128 samples per row, lanes [x0,x1,x0,x1,...]
    # e_ref : (256, 256) f32 VMEM -- constant 0/1 de-interleave matrix
    # params: unpadded SMEM scalars, PyTorch (out, in) layout:
    #         w1 (3,2), b1 (3,), w2 (1,3), b2 (1,)
    # o_ref : (tr, 128) f32 VMEM -- one y per lane (fully dense stores)

    # De-interleave on the (idle) MXU: xx = [x0 | x1], exact 0/1 selection.
    xx = jnp.dot(xw_ref[...], e_ref[...], preferred_element_type=jnp.float32)
    x0 = xx[:, :_LANES]      # (tr, 128)
    x1 = xx[:, _LANES:]      # (tr, 128)

    # fc1 + ReLU (dense VPU broadcast-FMAs, all f32)
    h0 = jnp.maximum(x0 * w1_ref[0, 0] + x1 * w1_ref[0, 1] + b1_ref[0], 0.0)
    h1 = jnp.maximum(x0 * w1_ref[1, 0] + x1 * w1_ref[1, 1] + b1_ref[1], 0.0)
    h2 = jnp.maximum(x0 * w1_ref[2, 0] + x1 * w1_ref[2, 1] + b1_ref[2], 0.0)

    # fc2
    y = h0 * w2_ref[0, 0] + h1 * w2_ref[0, 1] + h2 * w2_ref[0, 2] + b2_ref[0]
    o_ref[...] = y.astype(o_ref.dtype)


def _deinterleave_matrix():
    # E[2k, k] = 1 and E[2k+1, 128+k] = 1  =>  xw @ E = [x0 | x1].
    lane = jnp.arange(_ROW_W)
    col = jnp.where(lane % 2 == 0, lane // 2, _LANES + lane // 2)
    return (col[:, None] == jnp.arange(_ROW_W)[None, :]).astype(jnp.float32)


@jax.jit
def net_forward(x, w1, b1, w2, b2):
    """Pallas implementation of Net.forward.

    x : (B, 2) f32, w1: (3, 2) f32, b1: (3,) f32, w2: (1, 3) f32, b2: (1,) f32
    returns (B, 1) f32
    """
    B, in_f = x.shape
    assert in_f == _IN_F

    # ---- batch padding (slab row = 128 samples) -----------------------------
    if B < 8192:
        # Tiny batches: pad to whole 8-row slabs so the matmul M-dim is >= 8
        # (the copy is <= 64 KiB, i.e. negligible).
        bp = -(-B // (8 * _LANES)) * (8 * _LANES)
    else:
        # Large batches: zero extra HBM traffic when B is already 128-aligned.
        bp = -(-B // _LANES) * _LANES
    if bp != B:
        # TODO(synk): a fully copy-free ragged path would need manual DMA of the
        # tail; this pad copies x once and is only hit for small or non-128-
        # aligned batches.  Padded rows are sliced off below.
        x = jnp.concatenate([x, jnp.zeros((bp - B, in_f), x.dtype)], axis=0)

    r = bp // _LANES                        # slab rows (always >= 8)
    x_slab = x.reshape(r, _ROW_W)           # free, contiguous reshape

    # ---- row-tile selection --------------------------------------------------
    tr = min(_TR_MAX, r)
    if r >= 128:                            # >= ~16K samples: force >= 2 grid
        tr = min(tr, -(-r // 2))            # steps so both v7x TCs get work
    tr = max(8, (tr // 8) * 8)              # multiple of 8, <= r
    grid = -(-r // tr)                      # ragged last block is masked by Pallas

    e = _deinterleave_matrix()
    smem = pl.BlockSpec(memory_space=pltpu.MemorySpace.SMEM)

    out_slab = pl.pallas_call(
        _mlp_kernel,
        out_shape=jax.ShapeDtypeStruct((r, _LANES), jnp.float32),
        grid_spec=pltpu.PrefetchScalarGridSpec(
            num_scalar_prefetch=0,
            grid=(grid,),
            in_specs=[
                pl.BlockSpec((tr, _ROW_W), lambda i: (i, 0)),      # x slab tile
                pl.BlockSpec((_ROW_W, _ROW_W), lambda i: (0, 0)),  # E (resident)
                smem,  # w1
                smem,  # b1
                smem,  # w2
                smem,  # b2
            ],
            out_specs=pl.BlockSpec((tr, _LANES), lambda i: (i, 0)),
        ),
        compiler_params=pltpu.CompilerParams(
            dimension_semantics=("parallel",)),
    )(x_slab, e, w1, b1, w2, b2)

    out = out_slab.reshape(bp, 1)
    return out if bp == B else out[:B]


def init_params(key):
    """Deterministic init matching PyTorch nn.Linear default U(-1/sqrt(fan_in), +)."""
    k1, k2, k3, k4 = jax.random.split(key, 4)
    bound1 = 1.0 / jnp.sqrt(2.0)
    bound2 = 1.0 / jnp.sqrt(3.0)
    w1 = jax.random.uniform(k1, (3, 2), jnp.float32, -bound1, bound1)
    b1 = jax.random.uniform(k2, (3,), jnp.float32, -bound1, bound1)
    w2 = jax.random.uniform(k3, (1, 3), jnp.float32, -bound2, bound2)
    b2 = jax.random.uniform(k4, (1,), jnp.float32, -bound2, bound2)
    return w1, b1, w2, b2


def _reference(x, w1, b1, w2, b2):
    return jnp.maximum(x @ w1.T + b1, 0.0) @ w2.T + b2


if __name__ == "__main__":
    key = jax.random.PRNGKey(0)
    kx1, kx2, kx3, kp = jax.random.split(key, 4)
    w1, b1, w2, b2 = init_params(kp)

    cases = (
        ("tiny", 8, kx1),                  # single slab, pad path
        ("aligned", 8192, kx2),            # zero-copy path, single grid step
        ("ragged_multistep", 16448, kx3),  # pad + 3 grid steps + partial block
    )
    for name, bsz, kk in cases:
        x = jax.random.normal(kk, (bsz, _IN_F), jnp.float32)
        out = jax.block_until_ready(net_forward(x, w1, b1, w2, b2))
        ref = _reference(x, w1, b1, w2, b2)
        assert out.shape == (bsz, 1), (name, out.shape)
        assert jnp.allclose(out, ref, atol=1e-5, rtol=1e-5), name

    print("KERNEL_OK")
</pallas_src>

<mosaic_0001>
module attributes {stable_mosaic.version = 11 : i64} {
  func.func @_mlp_kernel(%arg0: i32, %arg1: memref<8x256xf32, #tpu.memory_space<vmem>>, %arg2: memref<256x256xf32, #tpu.memory_space<vmem>>, %arg3: memref<3x2xf32, #tpu.memory_space<smem>>, %arg4: memref<3xf32, #tpu.memory_space<smem>>, %arg5: memref<1x3xf32, #tpu.memory_space<smem>>, %arg6: memref<1xf32, #tpu.memory_space<smem>>, %arg7: memref<8x128xf32, #tpu.memory_space<vmem>>) attributes {dimension_semantics = [#tpu.dimension_semantics<parallel>], iteration_bounds = array<i64: 1>, scalar_prefetch = 0 : i64, scratch_operands = 0 : i64, tpu.core_type = #tpu.core_type<tc>, window_params = [{transform_indices = @transform_0, window_bounds = array<i64: 8, 256>}, {pipeline_mode = #tpu.pipeline_mode<synchronous>, transform_indices = @transform_1, window_bounds = array<i64: 256, 256>}, {transform_indices = @transform_2, window_bounds = array<i64: 3, 2>}, {transform_indices = @transform_3, window_bounds = array<i64: 3>}, {transform_indices = @transform_4, window_bounds = array<i64: 1, 3>}, {transform_indices = @transform_5, window_bounds = array<i64: 1>}, {transform_indices = @transform_6, window_bounds = array<i64: 8, 128>}]} {
    %c0 = arith.constant 0 : index
    %c0_0 = arith.constant 0 : index
    %0 = vector.load %arg1[%c0, %c0_0] : memref<8x256xf32, #tpu.memory_space<vmem>>, vector<8x256xf32>
    %c0_1 = arith.constant 0 : index
    %c0_2 = arith.constant 0 : index
    %1 = vector.load %arg2[%c0_1, %c0_2] : memref<256x256xf32, #tpu.memory_space<vmem>>, vector<256x256xf32>
    %cst = arith.constant dense<0.000000e+00> : vector<8x256xf32>
    %2 = tpu.matmul %0, %1, %cst {dimension_numbers = #tpu.dot_dimension_numbers<[1], [0], [0], [1], [0, 0, 1, 1], [], []>} : vector<8x256xf32>, vector<256x256xf32>, vector<8x256xf32> -> vector<8x256xf32>
    %3 = vector.extract_strided_slice %2 {offsets = [0, 0], sizes = [8, 128], strides = [1, 1]} : vector<8x256xf32> to vector<8x128xf32>
    %4 = vector.extract_strided_slice %2 {offsets = [0, 128], sizes = [8, 128], strides = [1, 1]} : vector<8x256xf32> to vector<8x128xf32>
    %c0_3 = arith.constant 0 : index
    %c0_4 = arith.constant 0 : index
    %5 = memref.load %arg3[%c0_3, %c0_4] : memref<3x2xf32, #tpu.memory_space<smem>>
    %6 = vector.broadcast %5 : f32 to vector<8x128xf32>
    %7 = arith.mulf %3, %6 : vector<8x128xf32>
    %c0_5 = arith.constant 0 : index
    %c1 = arith.constant 1 : index
    %8 = memref.load %arg3[%c0_5, %c1] : memref<3x2xf32, #tpu.memory_space<smem>>
    %9 = vector.broadcast %8 : f32 to vector<8x128xf32>
    %10 = arith.mulf %4, %9 : vector<8x128xf32>
    %11 = arith.addf %7, %10 : vector<8x128xf32>
    %c0_6 = arith.constant 0 : index
    %12 = memref.load %arg4[%c0_6] : memref<3xf32, #tpu.memory_space<smem>>
    %13 = vector.broadcast %12 : f32 to vector<8x128xf32>
    %14 = arith.addf %11, %13 : vector<8x128xf32>
    %cst_7 = arith.constant 0.000000e+00 : f32
    %15 = vector.broadcast %cst_7 : f32 to vector<8x128xf32>
    %16 = arith.maximumf %14, %15 : vector<8x128xf32>
    %c1_8 = arith.constant 1 : index
    %c0_9 = arith.constant 0 : index
    %17 = memref.load %arg3[%c1_8, %c0_9] : memref<3x2xf32, #tpu.memory_space<smem>>
    %18 = vector.broadcast %17 : f32 to vector<8x128xf32>
    %19 = arith.mulf %3, %18 : vector<8x128xf32>
    %c1_10 = arith.constant 1 : index
    %c1_11 = arith.constant 1 : index
    %20 = memref.load %arg3[%c1_10, %c1_11] : memref<3x2xf32, #tpu.memory_space<smem>>
    %21 = vector.broadcast %20 : f32 to vector<8x128xf32>
    %22 = arith.mulf %4, %21 : vector<8x128xf32>
    %23 = arith.addf %19, %22 : vector<8x128xf32>
    %c1_12 = arith.constant 1 : index
    %24 = memref.load %arg4[%c1_12] : memref<3xf32, #tpu.memory_space<smem>>
    %25 = vector.broadcast %24 : f32 to vector<8x128xf32>
    %26 = arith.addf %23, %25 : vector<8x128xf32>
    %cst_13 = arith.constant 0.000000e+00 : f32
    %27 = vector.broadcast %cst_13 : f32 to vector<8x128xf32>
    %28 = arith.maximumf %26, %27 : vector<8x128xf32>
    %c2 = arith.constant 2 : index
    %c0_14 = arith.constant 0 : index
    %29 = memref.load %arg3[%c2, %c0_14] : memref<3x2xf32, #tpu.memory_space<smem>>
    %30 = vector.broadcast %29 : f32 to vector<8x128xf32>
    %31 = arith.mulf %3, %30 : vector<8x128xf32>
    %c2_15 = arith.constant 2 : index
    %c1_16 = arith.constant 1 : index
    %32 = memref.load %arg3[%c2_15, %c1_16] : memref<3x2xf32, #tpu.memory_space<smem>>
    %33 = vector.broadcast %32 : f32 to vector<8x128xf32>
    %34 = arith.mulf %4, %33 : vector<8x128xf32>
    %35 = arith.addf %31, %34 : vector<8x128xf32>
    %c2_17 = arith.constant 2 : index
    %36 = memref.load %arg4[%c2_17] : memref<3xf32, #tpu.memory_space<smem>>
    %37 = vector.broadcast %36 : f32 to vector<8x128xf32>
    %38 = arith.addf %35, %37 : vector<8x128xf32>
    %cst_18 = arith.constant 0.000000e+00 : f32
    %39 = vector.broadcast %cst_18 : f32 to vector<8x128xf32>
    %40 = arith.maximumf %38, %39 : vector<8x128xf32>
    %c0_19 = arith.constant 0 : index
    %c0_20 = arith.constant 0 : index
    %41 = memref.load %arg5[%c0_19, %c0_20] : memref<1x3xf32, #tpu.memory_space<smem>>
    %42 = vector.broadcast %41 : f32 to vector<8x128xf32>
    %43 = arith.mulf %16, %42 : vector<8x128xf32>
    %c0_21 = arith.constant 0 : index
    %c1_22 = arith.constant 1 : index
    %44 = memref.load %arg5[%c0_21, %c1_22] : memref<1x3xf32, #tpu.memory_space<smem>>
    %45 = vector.broadcast %44 : f32 to vector<8x128xf32>
    %46 = arith.mulf %28, %45 : vector<8x128xf32>
    %47 = arith.addf %43, %46 : vector<8x128xf32>
    %c0_23 = arith.constant 0 : index
    %c2_24 = arith.constant 2 : index
    %48 = memref.load %arg5[%c0_23, %c2_24] : memref<1x3xf32, #tpu.memory_space<smem>>
    %49 = vector.broadcast %48 : f32 to vector<8x128xf32>
    %50 = arith.mulf %40, %49 : vector<8x128xf32>
    %51 = arith.addf %47, %50 : vector<8x128xf32>
    %c0_25 = arith.constant 0 : index
    %52 = memref.load %arg6[%c0_25] : memref<1xf32, #tpu.memory_space<smem>>
    %53 = vector.broadcast %52 : f32 to vector<8x128xf32>
    %54 = arith.addf %51, %53 : vector<8x128xf32>
    %c0_26 = arith.constant 0 : index
    %c0_27 = arith.constant 0 : index
    %55 = vector.load %arg7[%c0_26, %c0_27] : memref<8x128xf32, #tpu.memory_space<vmem>>, vector<8x128xf32>
    tpu.vector_store %arg7[%c0_26, %c0_27], %54 {strides = array<i32>} : memref<8x128xf32, #tpu.memory_space<vmem>>, vector<8x128xf32>,
    return
  }
  func.func @transform_0(%arg0: i32) -> (i32, i32) {
    %c0_i32 = arith.constant 0 : i32
    %c0_i32_0 = arith.constant 0 : i32
    return %arg0, %c0_i32 : i32, i32
  }
  func.func @transform_1(%arg0: i32) -> (i32, i32) {
    %c0_i32 = arith.constant 0 : i32
    %c0_i32_0 = arith.constant 0 : i32
    %c0_i32_1 = arith.constant 0 : i32
    return %c0_i32, %c0_i32_0 : i32, i32
  }
  func.func @transform_2(%arg0: i32) -> (i32, i32) {
    %c0_i32 = arith.constant 0 : i32
    %c0_i32_0 = arith.constant 0 : i32
    %c0_i32_1 = arith.constant 0 : i32
    return %c0_i32, %c0_i32_0 : i32, i32
  }
  func.func @transform_3(%arg0: i32) -> i32 {
    %c0_i32 = arith.constant 0 : i32
    %c0_i32_0 = arith.constant 0 : i32
    return %c0_i32 : i32
  }
  func.func @transform_4(%arg0: i32) -> (i32, i32) {
    %c0_i32 = arith.constant 0 : i32
    %c0_i32_0 = arith.constant 0 : i32
    %c0_i32_1 = arith.constant 0 : i32
    return %c0_i32, %c0_i32_0 : i32, i32
  }
  func.func @transform_5(%arg0: i32) -> i32 {
    %c0_i32 = arith.constant 0 : i32
    %c0_i32_0 = arith.constant 0 : i32
    return %c0_i32 : i32
  }
  func.func @transform_6(%arg0: i32) -> (i32, i32) {
    %c0_i32 = arith.constant 0 : i32
    %c0_i32_0 = arith.constant 0 : i32
    return %arg0, %c0_i32 : i32, i32
  }
}

</mosaic_0001>

<llo_original>
// kernel: net_forward.1
$region0: #{net_forward.1}
  #allocation0 [shape = 'u32[]', space=smem, size = 0x4, offset = 0x4, fixed_abs, tag = 'smem constant byte address 0x4 - core index']
  #allocation1 [shape = 'u32[144,128]{1,0:T(1,128)}', space=vmem, size = 0x12000, scoped, tag = 'internal scratch']
  #allocation2 [shape = 'f32[1]{0:T(128)S(6)}', space=smem, size = 0x200, scoped, tag = 'scoped memory for net_forward.1']
  %s0 = inlined_call_operand.vmem [shape: f32[8,256], index: 0, kind: input, shape index: {}]
  %s1 = inlined_call_operand.vmem [shape: f32[256,256], index: 1, kind: input, shape index: {}]
  %s2 = inlined_call_operand.vmem [shape: f32[3,2], index: 2, kind: input, shape index: {}]
  %s3 = inlined_call_operand.vmem [shape: f32[3], index: 3, kind: input, shape index: {}]
  %s4 = inlined_call_operand.vmem [shape: f32[1,3], index: 4, kind: input, shape index: {}]
  %s5 = inlined_call_operand.<no memory space> [shape: f32[1], index: 5, kind: input, shape index: {}]
  %s6 = inlined_call_operand.vmem [shape: f32[8,128], index: 6, kind: output, shape index: {}]
  %s7 = sld [smem:[#allocation0]]
  $region46: #{net_forward.1} parent=0
    _
  %s9 = ssub.s32 1, %s7
  %s10 = scalar_select 0, %s9, %s7
  %11 = sst [smem:[#allocation2]] %s5
  $region1: #{net_forward.1} parent=0
    #allocation3 [shape = 'u8[2048]{0}', space=smem, size = 0x800, scoped, tag = 'input window, operand 2, single buffered']
    #allocation4 [shape = 's32[1]{0}', space=sflag, size = 0x4, scoped, tag = 'scoped memory for net_forward.1']
    #allocation5 [shape = 'u8[512]{0}', space=smem, size = 0x200, scoped, tag = 'input window, operand 3, single buffered']
    #allocation6 [shape = 's32[1]{0}', space=sflag, size = 0x4, scoped, tag = 'scoped memory for net_forward.1']
    #allocation7 [shape = 'u8[512]{0}', space=smem, size = 0x200, scoped, tag = 'input window, operand 4, single buffered']
    %12 = vsyncpa [#allocation4], 0
    %13 = vsyncpa [#allocation6], 0
    // Predicated region
    $region2: #{net_forward.1} parent=1 // pred_check
      _
    $region3: #{net_forward.1} parent=1 // pred_check_branch
      %15 = sbr.rel (0) target = $region5
    $region4: #{net_forward.1} parent=1 // pred_region
      _
    $region5: #{net_forward.1} parent=1 // pred_fallthru
      _
    // Predicated region
    $region6: #{net_forward.1} parent=1 // pred_check
      _
    $region7: #{net_forward.1} parent=1 // pred_check_branch
      %17 = sbr.rel (0) target = $region9
    $region8: #{net_forward.1} parent=1 // pred_region
      _
    $region9: #{net_forward.1} parent=1 // pred_fallthru
      _
    // Predicated region
    $region10: #{net_forward.1} parent=1 // pred_check
      _
    $region11: #{net_forward.1} parent=1 // pred_check_branch
      %19 = sbr.rel (0) target = $region13
    $region12: #{net_forward.1} parent=1 // pred_region
      %s21 = ssub.s32 64, 64
      %22 = vsyncadd [#allocation4], %s21
      %s24 = sshll.u32 %s2, 4
      %s25 = int_to_ptr.vmem [resolvable:$true] %s24
      %27 = dma.vmem_to_smem %s25, 64, [#allocation3], [#allocation4]
    $region13: #{net_forward.1} parent=1 // pred_fallthru
      _
    // Predicated region
    $region14: #{net_forward.1} parent=1 // pred_check
      _
    $region15: #{net_forward.1} parent=1 // pred_check_branch
      %29 = sbr.rel (0) target = $region17
    $region16: #{net_forward.1} parent=1 // pred_region
      %s31 = ssub.s32 16, 16
      %32 = vsyncadd [#allocation6], %s31
      %s34 = sshll.u32 %s3, 4
      %s35 = int_to_ptr.vmem [resolvable:$true] %s34
      %37 = dma.vmem_to_smem %s35, 16, [#allocation5], [#allocation6]
    $region17: #{net_forward.1} parent=1 // pred_fallthru
      _
    // Predicated region
    $region18: #{net_forward.1} parent=1 // pred_check
      _
    $region19: #{net_forward.1} parent=1 // pred_check_branch
      %39 = sbr.rel (0) target = $region21
    $region20: #{net_forward.1} parent=1 // pred_region
      %s41 = ssub.s32 16, 16
      %42 = vsyncadd [#allocation6], %s41
      %s44 = sshll.u32 %s4, 4
      %s45 = int_to_ptr.vmem [resolvable:$true] %s44
      %47 = dma.vmem_to_smem %s45, 16, [#allocation7], [#allocation6]
    $region21: #{net_forward.1} parent=1 // pred_fallthru
      _
    // Predicated region
    $region22: #{net_forward.1} parent=1 // pred_check
      _
    $region23: #{net_forward.1} parent=1 // pred_check_branch
      %49 = sbr.rel (0) target = $region25
    $region24: #{net_forward.1} parent=1 // pred_region
      _
    $region25: #{net_forward.1} parent=1 // pred_fallthru
      _
    // Predicated region
    $region26: #{net_forward.1} parent=1 // pred_check
      _
    $region27: #{net_forward.1} parent=1 // pred_check_branch
      %51 = sbr.rel (0) target = $region29
    $region28: #{net_forward.1} parent=1 // pred_region
      %52 = dma.done [#allocation4], 64
    $region29: #{net_forward.1} parent=1 // pred_fallthru
      _
    // Predicated region
    $region30: #{net_forward.1} parent=1 // pred_check
      _
    $region31: #{net_forward.1} parent=1 // pred_check_branch
      %54 = sbr.rel (0) target = $region33
    $region32: #{net_forward.1} parent=1 // pred_region
      %55 = dma.done [#allocation6], 16
    $region33: #{net_forward.1} parent=1 // pred_fallthru
      _
    // Predicated region
    $region34: #{net_forward.1} parent=1 // pred_check
      _
    $region35: #{net_forward.1} parent=1 // pred_check_branch
      %57 = sbr.rel (0) target = $region37
    $region36: #{net_forward.1} parent=1 // pred_region
      %58 = dma.done [#allocation6], 16
    $region37: #{net_forward.1} parent=1 // pred_fallthru
      _
    %59 = sfence
    %v60 = vld [vmem:[%s0] sm:$0xff]
    %v61 = vld [vmem:[%s0 + $0x8] sm:$0xff]
    %v62 = vld [vmem:[%s1] sm:$0xff]
    %v63 = vld [vmem:[%s1 + $0x8] sm:$0xff]
    %v64 = vld [vmem:[%s1 + $0x10] sm:$0xff]
    %v65 = vld [vmem:[%s1 + $0x18] sm:$0xff]
    %v66 = vld [vmem:[%s1 + $0x20] sm:$0xff]
    %v67 = vld [vmem:[%s1 + $0x28] sm:$0xff]
    %v68 = vld [vmem:[%s1 + $0x30] sm:$0xff]
    %v69 = vld [vmem:[%s1 + $0x38] sm:$0xff]
    %v70 = vld [vmem:[%s1 + $0x40] sm:$0xff]
    %v71 = vld [vmem:[%s1 + $0x48] sm:$0xff]
    %v72 = vld [vmem:[%s1 + $0x50] sm:$0xff]
    %v73 = vld [vmem:[%s1 + $0x58] sm:$0xff]
    %v74 = vld [vmem:[%s1 + $0x60] sm:$0xff]
    %v75 = vld [vmem:[%s1 + $0x68] sm:$0xff]
    %v76 = vld [vmem:[%s1 + $0x70] sm:$0xff]
    %v77 = vld [vmem:[%s1 + $0x78] sm:$0xff]
    %v78 = vld [vmem:[%s1 + $0x80] sm:$0xff]
    %v79 = vld [vmem:[%s1 + $0x88] sm:$0xff]
    %v80 = vld [vmem:[%s1 + $0x90] sm:$0xff]
    %v81 = vld [vmem:[%s1 + $0x98] sm:$0xff]
    %v82 = vld [vmem:[%s1 + $0xa0] sm:$0xff]
    %v83 = vld [vmem:[%s1 + $0xa8] sm:$0xff]
    %v84 = vld [vmem:[%s1 + $0xb0] sm:$0xff]
    %v85 = vld [vmem:[%s1 + $0xb8] sm:$0xff]
    %v86 = vld [vmem:[%s1 + $0xc0] sm:$0xff]
    %v87 = vld [vmem:[%s1 + $0xc8] sm:$0xff]
    %v88 = vld [vmem:[%s1 + $0xd0] sm:$0xff]
    %v89 = vld [vmem:[%s1 + $0xd8] sm:$0xff]
    %v90 = vld [vmem:[%s1 + $0xe0] sm:$0xff]
    %v91 = vld [vmem:[%s1 + $0xe8] sm:$0xff]
    %v92 = vld [vmem:[%s1 + $0xf0] sm:$0xff]
    %v93 = vld [vmem:[%s1 + $0xf8] sm:$0xff]
    %v94 = vld [vmem:[%s1 + $0x100] sm:$0xff]
    %v95 = vld [vmem:[%s1 + $0x108] sm:$0xff]
    %v96 = vld [vmem:[%s1 + $0x110] sm:$0xff]
    %v97 = vld [vmem:[%s1 + $0x118] sm:$0xff]
    %v98 = vld [vmem:[%s1 + $0x120] sm:$0xff]
    %v99 = vld [vmem:[%s1 + $0x128] sm:$0xff]
    %v100 = vld [vmem:[%s1 + $0x130] sm:$0xff]
    %v101 = vld [vmem:[%s1 + $0x138] sm:$0xff]
    %v102 = vld [vmem:[%s1 + $0x140] sm:$0xff]
    %v103 = vld [vmem:[%s1 + $0x148] sm:$0xff]
    %v104 = vld [vmem:[%s1 + $0x150] sm:$0xff]
    %v105 = vld [vmem:[%s1 + $0x158] sm:$0xff]
    %v106 = vld [vmem:[%s1 + $0x160] sm:$0xff]
    %v107 = vld [vmem:[%s1 + $0x168] sm:$0xff]
    %v108 = vld [vmem:[%s1 + $0x170] sm:$0xff]
    %v109 = vld [vmem:[%s1 + $0x178] sm:$0xff]
    %v110 = vld [vmem:[%s1 + $0x180] sm:$0xff]
    %v111 = vld [vmem:[%s1 + $0x188] sm:$0xff]
    %v112 = vld [vmem:[%s1 + $0x190] sm:$0xff]
    %v113 = vld [vmem:[%s1 + $0x198] sm:$0xff]
    %v114 = vld [vmem:[%s1 + $0x1a0] sm:$0xff]
    %v115 = vld [vmem:[%s1 + $0x1a8] sm:$0xff]
    %v116 = vld [vmem:[%s1 + $0x1b0] sm:$0xff]
    %v117 = vld [vmem:[%s1 + $0x1b8] sm:$0xff]
    %v118 = vld [vmem:[%s1 + $0x1c0] sm:$0xff]
    %v119 = vld [vmem:[%s1 + $0x1c8] sm:$0xff]
    %v120 = vld [vmem:[%s1 + $0x1d0] sm:$0xff]
    %v121 = vld [vmem:[%s1 + $0x1d8] sm:$0xff]
    %v122 = vld [vmem:[%s1 + $0x1e0] sm:$0xff]
    %v123 = vld [vmem:[%s1 + $0x1e8] sm:$0xff]
    %v124 = vld [vmem:[%s1 + $0x1f0] sm:$0xff]
    %v125 = vld [vmem:[%s1 + $0x1f8] sm:$0xff]
    %126 = vmatprep.subr.mxu0 %v93
    %127 = vmatpush1.msra.mxu0 %v92
    %128 = vmatprep.subr.mxu0 %v91
    %129 = vmatpush1.msra.mxu0 %v90
    %130 = vmatprep.subr.mxu0 %v89
    %131 = vmatpush1.msra.mxu0 %v88
    %132 = vmatprep.subr.mxu0 %v87
    %133 = vmatpush1.msra.mxu0 %v86
    %134 = vmatprep.subr.mxu0 %v85
    %135 = vmatpush1.msra.mxu0 %v84
    %136 = vmatprep.subr.mxu0 %v83
    %137 = vmatpush1.msra.mxu0 %v82
    %138 = vmatprep.subr.mxu0 %v81
    %139 = vmatpush1.msra.mxu0 %v80
    %140 = vmatprep.subr.mxu0 %v79
    %141 = vmatpush1.msra.mxu0 %v78
    %142 = vmatprep.subr.mxu0 %v77
    %143 = vmatpush1.msra.mxu0 %v76
    %144 = vmatprep.subr.mxu0 %v75
    %145 = vmatpush1.msra.mxu0 %v74
    %146 = vmatprep.subr.mxu0 %v73
    %147 = vmatpush1.msra.mxu0 %v72
    %148 = vmatprep.subr.mxu0 %v71
    %149 = vmatpush1.msra.mxu0 %v70
    %150 = vmatprep.subr.mxu0 %v69
    %151 = vmatpush1.msra.mxu0 %v68
    %152 = vmatprep.subr.mxu0 %v67
    %153 = vmatpush1.msra.mxu0 %v66
    %154 = vmatprep.subr.mxu0 %v65
    %155 = vmatpush1.msra.mxu0 %v64
    %156 = vmatprep.subr.mxu0 %v63
    %157 = vmatpush1.msra.mxu0 %v62
    %158 = vmatprep.subr.mxu0 %v125
    %159 = vmatpush2.msra.mxu0 %v124
    %160 = vmatprep.subr.mxu0 %v123
    %161 = vmatpush2.msra.mxu0 %v122
    %162 = vmatprep.subr.mxu0 %v121
    %163 = vmatpush2.msra.mxu0 %v120
    %164 = vmatprep.subr.mxu0 %v119
    %165 = vmatpush2.msra.mxu0 %v118
    %166 = vmatprep.subr.mxu0 %v117
    %167 = vmatpush2.msra.mxu0 %v116
    %168 = vmatprep.subr.mxu0 %v115
    %169 = vmatpush2.msra.mxu0 %v114
    %170 = vmatprep.subr.mxu0 %v113
    %171 = vmatpush2.msra.mxu0 %v112
    %172 = vmatprep.subr.mxu0 %v111
    %173 = vmatpush2.msra.mxu0 %v110
    %174 = vmatprep.subr.mxu0 %v109
    %175 = vmatpush2.msra.mxu0 %v108
    %176 = vmatprep.subr.mxu0 %v107
    %177 = vmatpush2.msra.mxu0 %v106
    %178 = vmatprep.subr.mxu0 %v105
    %179 = vmatpush2.msra.mxu0 %v104
    %180 = vmatprep.subr.mxu0 %v103
    %181 = vmatpush2.msra.mxu0 %v102
    %182 = vmatprep.subr.mxu0 %v101
    %183 = vmatpush2.msra.mxu0 %v100
    %184 = vmatprep.subr.mxu0 %v99
    %185 = vmatpush2.msra.mxu0 %v98
    %186 = vmatprep.subr.mxu0 %v97
    %187 = vmatpush2.msra.mxu0 %v96
    %188 = vmatprep.subr.mxu0 %v95
    %189 = vmatpush2.msra.mxu0 %v94
    %190 = vmatprep.mubr.f32.mxu0 %v61
    %191 = vmatmul.mubr.f32.gmra.mxu0 %v60
    %v192 = vpop.f32.mrf.mxu0
    %v193 = vadd.f32 0.0, %v192
    %v194 = vpop.f32.mrf.mxu0
    %v195 = vadd.f32 0.0, %v194
    %196 = vdwg.mxu0
    %s197 = sld [smem:[#allocation3]]
    %v198 = vstv %s197
    %v199 = vmul.f32 %v193, %v198
    %s200 = sld [smem:[#allocation3 + $0x1]]
    %v201 = vstv %s200
    %v202 = vmul.f32 %v195, %v201
    %v203 = vadd.f32 %v199, %v202
    %s204 = sld [smem:[#allocation5]]
    %v205 = vstv %s204
    %v206 = vadd.f32 %v203, %v205
    %v207 = vmax.f32 %v206, 0.0
    %s208 = sld [smem:[#allocation3 + $0x80]]
    %v209 = vstv %s208
    %v210 = vmul.f32 %v193, %v209
    %s211 = sld [smem:[#allocation3 + $0x81]]
    %v212 = vstv %s211
    %v213 = vmul.f32 %v195, %v212
    %v214 = vadd.f32 %v210, %v213
    %s215 = sld [smem:[#allocation5 + $0x1]]
    %v216 = vstv %s215
    %v217 = vadd.f32 %v214, %v216
    %v218 = vmax.f32 %v217, 0.0
    %s219 = sld [smem:[#allocation3 + $0x100]]
    %v220 = vstv %s219
    %v221 = vmul.f32 %v193, %v220
    %s222 = sld [smem:[#allocation3 + $0x101]]
    %v223 = vstv %s222
    %v224 = vmul.f32 %v195, %v223
    %v225 = vadd.f32 %v221, %v224
    %s226 = sld [smem:[#allocation5 + $0x2]]
    %v227 = vstv %s226
    %v228 = vadd.f32 %v225, %v227
    %v229 = vmax.f32 %v228, 0.0
    %s230 = sld [smem:[#allocation7]]
    %v231 = vstv %s230
    %v232 = vmul.f32 %v207, %v231
    %s233 = sld [smem:[#allocation7 + $0x1]]
    %v234 = vstv %s233
    %v235 = vmul.f32 %v218, %v234
    %v236 = vadd.f32 %v232, %v235
    %s237 = sld [smem:[#allocation7 + $0x2]]
    %v238 = vstv %s237
    %v239 = vmul.f32 %v229, %v238
    %v240 = vadd.f32 %v236, %v239
    %s241 = sld [smem:[#allocation2]]
    %v242 = vstv %s241
    %v243 = vadd.f32 %v240, %v242
    %244 = vst [vmem:[%s6] sm:$0xff] %v243
    // Predicated region
    $region38: #{net_forward.1} parent=1 // pred_check
      _
    $region39: #{net_forward.1} parent=1 // pred_check_branch
      %246 = sbr.rel (0) target = $region41
    $region40: #{net_forward.1} parent=1 // pred_region
      _
    $region41: #{net_forward.1} parent=1 // pred_fallthru
      _
    // Predicated region
    $region42: #{net_forward.1} parent=1 // pred_check
      _
    $region43: #{net_forward.1} parent=1 // pred_check_branch
      %248 = sbr.rel (0) target = $region45
    $region44: #{net_forward.1} parent=1 // pred_region
      _
    $region45: #{net_forward.1} parent=1 // pred_fallthru
      _
    %249 = vsyncpa [#allocation4], 1
    %250 = vsyncpa [#allocation6], 1

</llo_original>
